<compile_context>
chip_gen: v6e
topology: v6e:2x2x1
jax: 0.10.0
libtpu: 0.0.40
codegen_flags: <defaults>
</compile_context>

<pallas_src>
import functools

import jax
import jax.numpy as jnp
from jax import lax
from jax.experimental import pallas as pl
from jax.experimental.pallas import tpu as pltpu

NUM_IN_FEATURES = 6
NUM_OUT_FEATURES = 12
_LANE = 128

# Per-grid-step VMEM target: double-buffered in/out blocks + f32 intermediates.
# Kept well under the 32 MiB scoped default of v6e/v7x (v7x physical VMEM is
# only 64 MiB, so we deliberately do NOT raise the limit toward 64 MiB).
_TARGET_VMEM_BYTES = 20 * 1024 * 1024
_VMEM_LIMIT_BYTES = 32 * 1024 * 1024


def _round_up(x: int, m: int) -> int:
    return (x + m - 1) // m * m


def _cdiv(a: int, b: int) -> int:
    return (a + b - 1) // b


def _sublane_mult(dtype) -> int:
    """Sublane tile height for a dtype (8 rows for 4-byte, 16 for 2-byte, ...)."""
    return max(8, 32 // jnp.dtype(dtype).itemsize)


def _bytes_per_lane(sp: int, in_dtype, out_dtype) -> int:
    """VMEM bytes per lane of tile: double-buffered blocks + f32 intermediates."""
    ib = jnp.dtype(in_dtype).itemsize
    ob = jnp.dtype(out_dtype).itemsize
    blocks = 2 * NUM_IN_FEATURES * sp * ib + 2 * NUM_OUT_FEATURES * sp * ob
    # dyn(3) + rolled dyn(3) + d1(3) + rolled acc(2) + jerk(2) + speed(1) planes, f32.
    intermediates = 14 * sp * 4
    return blocks + intermediates


def _max_lane_tile(sp: int, in_dtype, out_dtype) -> int:
    per = _bytes_per_lane(sp, in_dtype, out_dtype)
    return max(_LANE, _TARGET_VMEM_BYTES // per // _LANE * _LANE)


def _feature_augmenter_kernel(x_ref, o_ref, *, sp: int):
    """x_ref: (6*sp, TN) feature-major; o_ref: (12*sp, TN) feature-major.

    Plane order (matches torch.cat in the reference):
      in : 0 pos_x, 1 pos_y, 2 vel_x, 3 vel_y, 4 heading, 5 obj_type
      out: 0 pos_x, 1 pos_y, 2 vel_x, 3 vel_y, 4 acc_x, 5 acc_y, 6 jerk_x,
           7 jerk_y, 8 heading, 9 angular_vel, 10 speed, 11 obj_type
    """
    SP = sp
    odt = o_ref.dtype

    # Pass-through planes: static, sublane-aligned ref slices -> unmasked vst.
    o_ref[0:4 * SP, :] = x_ref[0:4 * SP, :].astype(odt)              # pos, vel
    o_ref[8 * SP:9 * SP, :] = x_ref[4 * SP:5 * SP, :].astype(odt)    # heading
    o_ref[11 * SP:12 * SP, :] = x_ref[5 * SP:6 * SP, :].astype(odt)  # obj_type

    # Dynamic planes (vel_x, vel_y, heading), promoted to f32 for the diffs.
    dyn = x_ref[2 * SP:5 * SP, :].astype(jnp.float32)                # (3*SP, TN)

    # keep[r] = 0.0 on the t==0 row of each stacked plane, else 1.0.  Built once
    # at lane-width 1 (broadcast along lanes by the multiply), reused for jerk.
    row = lax.broadcasted_iota(jnp.int32, (3 * SP, 1), 0)
    keep = jnp.where((row == 0) | (row == SP) | (row == 2 * SP), 0.0, 1.0)

    # Level-1 diffs via ONE sublane roll: d1[t] = x[t] - x[t-1], d1[0] = 0.
    # The roll wraps across plane boundaries, but only t==0 rows are affected
    # and those are zeroed by `keep`.  Rows t in [seq_len, SP) are layout
    # padding and are discarded by the caller.
    d1 = (dyn - pltpu.roll(dyn, shift=1, axis=0)) * keep
    acc = d1[0:2 * SP, :]                                            # acc_x, acc_y
    angular_vel = d1[2 * SP:3 * SP, :]

    # Level-2 diff (jerk) from acc, same trick, reusing the mask.
    jerk = (acc - pltpu.roll(acc, shift=1, axis=0)) * keep[0:2 * SP]

    # speed = sqrt(vx^2 + vy^2): pure VPU/EUP, no cross-lane reduce.
    vx = dyn[0:SP, :]
    vy = dyn[SP:2 * SP, :]
    speed = jnp.sqrt(vx * vx + vy * vy)

    o_ref[4 * SP:6 * SP, :] = acc.astype(odt)
    o_ref[6 * SP:8 * SP, :] = jerk.astype(odt)
    o_ref[9 * SP:10 * SP, :] = angular_vel.astype(odt)
    o_ref[10 * SP:11 * SP, :] = speed.astype(odt)


def _call_augment_kernel(x_fm, *, sp, tn, out_dtype):
    rows, n = x_fm.shape
    assert rows == NUM_IN_FEATURES * sp and n % tn == 0, (rows, n, sp, tn)
    grid = n // tn
    return pl.pallas_call(
        functools.partial(_feature_augmenter_kernel, sp=sp),
        out_shape=jax.ShapeDtypeStruct((NUM_OUT_FEATURES * sp, n), out_dtype),
        grid_spec=pl.GridSpec(
            grid=(grid,),
            in_specs=[pl.BlockSpec((NUM_IN_FEATURES * sp, tn), lambda i: (0, i))],
            out_specs=pl.BlockSpec((NUM_OUT_FEATURES * sp, tn), lambda i: (0, i)),
        ),
        compiler_params=pltpu.CompilerParams(
            # Grid axis is fully independent -> sharded across TensorCores
            # (v7x megacore); the tile choosers target >= 4 steps for it.
            dimension_semantics=("parallel",),
            vmem_limit_bytes=_VMEM_LIMIT_BYTES,
        ),
    )(x_fm)


def _pick_divisor_tile(n: int, tn_max: int) -> int:
    """Largest 128-multiple lane tile that divides n exactly (zero padding),
    preferring >= 4 grid steps (2 per v7x TensorCore) while keeping >= 512 lanes."""
    u = n // _LANE
    cap = max(1, tn_max // _LANE)
    divisors = [d for d in range(1, min(u, cap) + 1) if u % d == 0]
    preferred = [d for d in divisors if u // d >= 4 and d * _LANE >= 512]
    return (max(preferred) if preferred else max(divisors)) * _LANE


def _pick_steps_tile(n_rounded: int, tn_max: int):
    """(lane_tile, padded_N).  Searches nearby grid-step counts so lane padding
    is bounded by a few 128-lane groups (never a whole huge tile) while meeting
    the VMEM budget and giving >= 4 steps when tiles can stay >= 512 lanes."""
    if n_rounded >= 4 * 512:
        min_steps = 4
    elif n_rounded >= 2 * 512:
        min_steps = 2
    else:
        min_steps = 1
    steps_lo = max(_cdiv(n_rounded, tn_max), min_steps)
    best_tn, best_pad = None, None
    for s in range(steps_lo, steps_lo + 5):
        tn = _round_up(_cdiv(n_rounded, s), _LANE)
        n_pad = _cdiv(n_rounded, tn) * tn
        if best_pad is None or n_pad < best_pad:
            best_tn, best_pad = tn, n_pad
    return best_tn, best_pad


def feature_augmenter_feature_major(x_fm, *, seq_pitch: int, out_dtype=None):
    """Zero-relayout FeatureAugmenter (review option (a)).

    Args:
        x_fm: (6*seq_pitch, N) feature-major input, rows = f*seq_pitch + t,
            lanes = flattened batch*agents.  N must be a multiple of 128 and
            seq_pitch a multiple of 8 (16 for 16-bit dtypes).  Rows t >= the
            real seq_length and lanes >= the real batch*agents are padding.
        seq_pitch: per-plane row pitch (sublane-padded seq length).
        out_dtype: output dtype (default x_fm.dtype); pass bf16 to cut the
            12-plane writeback in half for a bf16 consumer.
    Returns:
        (12*seq_pitch, N) feature-major augmented features.  Padding rows/lanes
        contain unspecified (finite, given finite inputs) values.
    """
    odt = jnp.dtype(out_dtype) if out_dtype is not None else x_fm.dtype
    rows, n = x_fm.shape
    assert rows == NUM_IN_FEATURES * seq_pitch, (rows, seq_pitch)
    assert n % _LANE == 0, n
    assert seq_pitch % 8 == 0, seq_pitch
    tn = _pick_divisor_tile(n, _max_lane_tile(seq_pitch, x_fm.dtype, odt))
    return _call_augment_kernel(x_fm, sp=seq_pitch, tn=tn, out_dtype=odt)


@functools.partial(jax.jit, static_argnames=("out_dtype",))
def feature_augmenter(x, out_dtype=None):
    """Drop-in FeatureAugmenter.forward on natural-layout input.

    Args:
        x: (batch, num_agents, seq_length, 6).
    Returns:
        (batch, num_agents, seq_length, 12), dtype `out_dtype` (default x.dtype).

    Pays one fused relayout pass per side to reach the lane-dense feature-major
    kernel layout; use `feature_augmenter_feature_major` in a feature-major
    pipeline to avoid the relayouts entirely.
    """
    B, A, S, F = x.shape
    assert F == NUM_IN_FEATURES, f"expected last dim {NUM_IN_FEATURES}, got {F}"
    odt = jnp.dtype(out_dtype) if out_dtype is not None else x.dtype
    BA = B * A

    sp = _round_up(S, max(_sublane_mult(x.dtype), _sublane_mult(odt)))
    n_rounded = _round_up(BA, _LANE)
    tn, n_pad = _pick_steps_tile(n_rounded, _max_lane_tile(sp, x.dtype, odt))

    # Natural -> feature-major.  Pad (lanes + seq pitch) + transpose + reshape
    # fuse into a single relayout pass under this jit; padding is zero so
    # derived planes stay finite (no NaN from sqrt on garbage lanes).
    x3 = jnp.pad(x.reshape(BA, S, F), ((0, n_pad - BA), (0, sp - S), (0, 0)))
    x_fm = jnp.transpose(x3, (2, 1, 0)).reshape(F * sp, n_pad)

    out_fm = _call_augment_kernel(x_fm, sp=sp, tn=tn, out_dtype=odt)

    # Feature-major -> natural; slice off layout padding; fused under the jit.
    out = out_fm.reshape(NUM_OUT_FEATURES, sp, n_pad)[:, :S, :BA]
    return jnp.transpose(out, (2, 1, 0)).reshape(B, A, S, NUM_OUT_FEATURES)


def _feature_augmenter_ref(x):
    """Pure-JAX reference mirroring the PyTorch forward exactly."""
    pos = x[..., 0:2]
    vel = x[..., 2:4]
    heading = x[..., 4:5]
    obj_type = x[..., 5:6]

    acc = jnp.zeros_like(vel)
    acc = acc.at[:, :, 1:, :].set(vel[:, :, 1:, :] - vel[:, :, :-1, :])
    jerk = jnp.zeros_like(vel)
    jerk = jerk.at[:, :, 1:, :].set(acc[:, :, 1:, :] - acc[:, :, :-1, :])
    speed = jnp.linalg.norm(vel, axis=-1, keepdims=True)
    angular_vel = jnp.zeros_like(heading)
    angular_vel = angular_vel.at[:, :, 1:, :].set(
        heading[:, :, 1:, :] - heading[:, :, :-1, :]
    )
    return jnp.concatenate(
        [pos, vel, acc, jerk, heading, angular_vel, speed, obj_type], axis=-1
    )


if __name__ == "__main__":
    k1, k2 = jax.random.split(jax.random.PRNGKey(0))

    # Small shapes consistent with the module: batch=2, agents=4, seq=8, feat=6.
    B, A, S = 2, 4, 8
    x = jax.random.normal(k1, (B, A, S, NUM_IN_FEATURES), dtype=jnp.float32)
    out = jax.block_until_ready(feature_augmenter(x))
    ref = _feature_augmenter_ref(x)
    assert out.shape == (B, A, S, NUM_OUT_FEATURES), out.shape
    assert jnp.allclose(out, ref, atol=1e-5, rtol=1e-5), "mismatch vs reference"

    # Awkward shape: non-multiple-of-8 seq (sublane-aligned plane pitch) and
    # non-multiple-of-128 agent count (lane padding).
    B2, A2, S2 = 3, 11, 13
    x2 = jax.random.normal(k2, (B2, A2, S2, NUM_IN_FEATURES), dtype=jnp.float32)
    out2 = jax.block_until_ready(feature_augmenter(x2))
    ref2 = _feature_augmenter_ref(x2)
    assert out2.shape == (B2, A2, S2, NUM_OUT_FEATURES), out2.shape
    assert jnp.allclose(out2, ref2, atol=1e-5, rtol=1e-5), "mismatch vs reference (2)"

    # Zero-relayout feature-major path (review option (a)): layout prepared once
    # by the pipeline, kernel called with no transposes around it.
    BA = B * A
    sp, n = 8, 128
    x_fm = jnp.transpose(
        jnp.pad(x.reshape(BA, S, NUM_IN_FEATURES), ((0, n - BA), (0, 0), (0, 0))),
        (2, 1, 0),
    ).reshape(NUM_IN_FEATURES * sp, n)
    out_fm = jax.block_until_ready(
        feature_augmenter_feature_major(x_fm, seq_pitch=sp)
    )
    out_fm_nat = jnp.transpose(
        out_fm.reshape(NUM_OUT_FEATURES, sp, n)[:, :S, :BA], (2, 1, 0)
    ).reshape(B, A, S, NUM_OUT_FEATURES)
    assert jnp.allclose(out_fm_nat, ref, atol=1e-5, rtol=1e-5), "mismatch (fm path)"

    # Optional narrower writeback (review item 8): bf16 output for bf16 consumers.
    out_bf16 = jax.block_until_ready(feature_augmenter(x, out_dtype=jnp.bfloat16))
    assert out_bf16.dtype == jnp.bfloat16, out_bf16.dtype
    assert jnp.allclose(out_bf16.astype(jnp.float32), ref, atol=5e-2, rtol=5e-2), \
        "mismatch vs reference (bf16 writeback)"

    print("KERNEL_OK")
</pallas_src>

<mosaic_0001>
module attributes {stable_mosaic.version = 11 : i64} {
  func.func @_feature_augmenter_kernel(%arg0: i32, %arg1: memref<48x128xf32, #tpu.memory_space<vmem>>, %arg2: memref<96x128xf32, #tpu.memory_space<vmem>>) attributes {dimension_semantics = [#tpu.dimension_semantics<parallel>], iteration_bounds = array<i64: 1>, scalar_prefetch = 0 : i64, scratch_operands = 0 : i64, tpu.core_type = #tpu.core_type<tc>, window_params = [{transform_indices = @transform_0, window_bounds = array<i64: 48, 128>}, {transform_indices = @transform_1, window_bounds = array<i64: 96, 128>}]} {
    %c0 = arith.constant 0 : index
    %c0_0 = arith.constant 0 : index
    %0 = vector.load %arg1[%c0, %c0_0] : memref<48x128xf32, #tpu.memory_space<vmem>>, vector<32x128xf32>
    %c0_1 = arith.constant 0 : index
    %c0_2 = arith.constant 0 : index
    %1 = vector.load %arg2[%c0_1, %c0_2] : memref<96x128xf32, #tpu.memory_space<vmem>>, vector<32x128xf32>
    tpu.vector_store %arg2[%c0_1, %c0_2], %0 {strides = array<i32>} : memref<96x128xf32, #tpu.memory_space<vmem>>, vector<32x128xf32>,
    %c32 = arith.constant 32 : index
    %c0_3 = arith.constant 0 : index
    %2 = vector.load %arg1[%c32, %c0_3] : memref<48x128xf32, #tpu.memory_space<vmem>>, vector<8x128xf32>
    %c64 = arith.constant 64 : index
    %c0_4 = arith.constant 0 : index
    %3 = vector.load %arg2[%c64, %c0_4] : memref<96x128xf32, #tpu.memory_space<vmem>>, vector<8x128xf32>
    tpu.vector_store %arg2[%c64, %c0_4], %2 {strides = array<i32>} : memref<96x128xf32, #tpu.memory_space<vmem>>, vector<8x128xf32>,
    %c40 = arith.constant 40 : index
    %c0_5 = arith.constant 0 : index
    %4 = vector.load %arg1[%c40, %c0_5] : memref<48x128xf32, #tpu.memory_space<vmem>>, vector<8x128xf32>
    %c88 = arith.constant 88 : index
    %c0_6 = arith.constant 0 : index
    %5 = vector.load %arg2[%c88, %c0_6] : memref<96x128xf32, #tpu.memory_space<vmem>>, vector<8x128xf32>
    tpu.vector_store %arg2[%c88, %c0_6], %4 {strides = array<i32>} : memref<96x128xf32, #tpu.memory_space<vmem>>, vector<8x128xf32>,
    %c16 = arith.constant 16 : index
    %c0_7 = arith.constant 0 : index
    %6 = vector.load %arg1[%c16, %c0_7] : memref<48x128xf32, #tpu.memory_space<vmem>>, vector<24x128xf32>
    %7 = tpu.iota {dimensions = array<i32: 0>} : vector<24x1xi32>
    %c0_i32 = arith.constant 0 : i32
    %8 = vector.broadcast %c0_i32 : i32 to vector<24x1xi32>
    %9 = arith.cmpi eq, %7, %8 : vector<24x1xi32>
    %c8_i32 = arith.constant 8 : i32
    %10 = vector.broadcast %c8_i32 : i32 to vector<24x1xi32>
    %11 = arith.cmpi eq, %7, %10 : vector<24x1xi32>
    %12 = arith.ori %9, %11 : vector<24x1xi1>
    %c16_i32 = arith.constant 16 : i32
    %13 = vector.broadcast %c16_i32 : i32 to vector<24x1xi32>
    %14 = arith.cmpi eq, %7, %13 : vector<24x1xi32>
    %15 = arith.ori %12, %14 : vector<24x1xi1>
    %cst = arith.constant 0.000000e+00 : f32
    %cst_8 = arith.constant 1.000000e+00 : f32
    %16 = vector.broadcast %cst : f32 to vector<24x1xf32>
    %17 = vector.broadcast %cst_8 : f32 to vector<24x1xf32>
    %18 = arith.select %15, %16, %17 : vector<24x1xi1>, vector<24x1xf32>
    %c1_i32 = arith.constant 1 : i32
    %19 = tpu.dynamic_rotate %6 by %c1_i32 dim 0 : vector<24x128xf32>, i32 -> vector<24x128xf32>
    %20 = arith.subf %6, %19 : vector<24x128xf32>
    %21 = vector.broadcast %18 : vector<24x1xf32> to vector<24x128xf32>
    %22 = arith.mulf %20, %21 : vector<24x128xf32>
    %23 = vector.extract_strided_slice %22 {offsets = [0, 0], sizes = [16, 128], strides = [1, 1]} : vector<24x128xf32> to vector<16x128xf32>
    %24 = vector.extract_strided_slice %22 {offsets = [16, 0], sizes = [8, 128], strides = [1, 1]} : vector<24x128xf32> to vector<8x128xf32>
    %c1_i32_9 = arith.constant 1 : i32
    %25 = tpu.dynamic_rotate %23 by %c1_i32_9 dim 0 : vector<16x128xf32>, i32 -> vector<16x128xf32>
    %26 = arith.subf %23, %25 : vector<16x128xf32>
    %27 = vector.extract_strided_slice %18 {offsets = [0, 0], sizes = [16, 1], strides = [1, 1]} : vector<24x1xf32> to vector<16x1xf32>
    %28 = vector.broadcast %27 : vector<16x1xf32> to vector<16x128xf32>
    %29 = arith.mulf %26, %28 : vector<16x128xf32>
    %30 = vector.extract_strided_slice %6 {offsets = [0, 0], sizes = [8, 128], strides = [1, 1]} : vector<24x128xf32> to vector<8x128xf32>
    %31 = vector.extract_strided_slice %6 {offsets = [8, 0], sizes = [8, 128], strides = [1, 1]} : vector<24x128xf32> to vector<8x128xf32>
    %32 = arith.mulf %30, %30 : vector<8x128xf32>
    %33 = arith.mulf %31, %31 : vector<8x128xf32>
    %34 = arith.addf %32, %33 : vector<8x128xf32>
    %35 = math.sqrt %34 : vector<8x128xf32>
    %c32_10 = arith.constant 32 : index
    %c0_11 = arith.constant 0 : index
    %36 = vector.load %arg2[%c32_10, %c0_11] : memref<96x128xf32, #tpu.memory_space<vmem>>, vector<16x128xf32>
    tpu.vector_store %arg2[%c32_10, %c0_11], %23 {strides = array<i32>} : memref<96x128xf32, #tpu.memory_space<vmem>>, vector<16x128xf32>,
    %c48 = arith.constant 48 : index
    %c0_12 = arith.constant 0 : index
    %37 = vector.load %arg2[%c48, %c0_12] : memref<96x128xf32, #tpu.memory_space<vmem>>, vector<16x128xf32>
    tpu.vector_store %arg2[%c48, %c0_12], %29 {strides = array<i32>} : memref<96x128xf32, #tpu.memory_space<vmem>>, vector<16x128xf32>,
    %c72 = arith.constant 72 : index
    %c0_13 = arith.constant 0 : index
    %38 = vector.load %arg2[%c72, %c0_13] : memref<96x128xf32, #tpu.memory_space<vmem>>, vector<8x128xf32>
    tpu.vector_store %arg2[%c72, %c0_13], %24 {strides = array<i32>} : memref<96x128xf32, #tpu.memory_space<vmem>>, vector<8x128xf32>,
    %c80 = arith.constant 80 : index
    %c0_14 = arith.constant 0 : index
    %39 = vector.load %arg2[%c80, %c0_14] : memref<96x128xf32, #tpu.memory_space<vmem>>, vector<8x128xf32>
    tpu.vector_store %arg2[%c80, %c0_14], %35 {strides = array<i32>} : memref<96x128xf32, #tpu.memory_space<vmem>>, vector<8x128xf32>,
    return
  }
  func.func @transform_0(%arg0: i32) -> (i32, i32) {
    %c0_i32 = arith.constant 0 : i32
    %c0_i32_0 = arith.constant 0 : i32
    return %c0_i32, %arg0 : i32, i32
  }
  func.func @transform_1(%arg0: i32) -> (i32, i32) {
    %c0_i32 = arith.constant 0 : i32
    %c0_i32_0 = arith.constant 0 : i32
    return %c0_i32, %arg0 : i32, i32
  }
}

</mosaic_0001>

<llo_original>
// kernel: feature_augmenter.1
$region0: #{feature_augmenter.1}
  #allocation0 [shape = 'u32[]', space=smem, size = 0x4, offset = 0x4, fixed_abs, tag = 'smem constant byte address 0x4 - core index']
  #allocation1 [shape = 'u32[144,128]{1,0:T(1,128)}', space=vmem, size = 0x12000, scoped, tag = 'internal scratch']
  %s0 = inlined_call_operand.vmem [shape: f32[48,128], index: 0, kind: input, shape index: {}]
  %s1 = inlined_call_operand.vmem [shape: f32[96,128], index: 1, kind: output, shape index: {}]
  %s2 = sld [smem:[#allocation0]]
  $region14: #{feature_augmenter.1} parent=0
    _
  %s4 = ssub.s32 1, %s2
  %s5 = scalar_select 0, %s4, %s2
  // Predicated region
  $region2: #{feature_augmenter.1} parent=0 // pred_check
    _
  $region3: #{feature_augmenter.1} parent=0 // pred_check_branch
    %7 = sbr.rel (0) target = $region5
  $region4: #{feature_augmenter.1} parent=0 // pred_region
    _
  $region5: #{feature_augmenter.1} parent=0 // pred_fallthru
    _
  %v8 = vld [vmem:[%s0] sm:$0xff]
  %v9 = vld [vmem:[%s0 + $0x8] sm:$0xff]
  %v10 = vld [vmem:[%s0 + $0x10] sm:$0xff]
  %v11 = vld [vmem:[%s0 + $0x18] sm:$0xff]
  %12 = vst [vmem:[%s1] sm:$0xff] %v8
  %13 = vst [vmem:[%s1 + $0x8] sm:$0xff] %v9
  %14 = vst [vmem:[%s1 + $0x10] sm:$0xff] %v10
  %15 = vst [vmem:[%s1 + $0x18] sm:$0xff] %v11
  %v16 = vld [vmem:[%s0 + $0x20] sm:$0xff]
  %17 = vst [vmem:[%s1 + $0x40] sm:$0xff] %v16
  %v18 = vld [vmem:[%s0 + $0x28] sm:$0xff]
  %19 = vst [vmem:[%s1 + $0x58] sm:$0xff] %v18
  %v20 = vld [vmem:[%s0 + $0x10] sm:$0xff]
  %v21 = vld [vmem:[%s0 + $0x18] sm:$0xff]
  %v22 = vld [vmem:[%s0 + $0x20] sm:$0xff]
  %v23 = vlaneseq
  %v24 = vshrl.u32 %v23, 7
  %v25 = vadd.s32 %v24, 8
  %v26 = vadd.s32 %v24, 16
  %vm27 = vcmp.eq.s32.totalorder %v24, 0
  %vm28 = vcmp.eq.s32.totalorder %v25, 0
  %vm29 = vcmp.eq.s32.totalorder %v26, 0
  %vm30 = vcmp.eq.s32.totalorder %v24, 8
  %vm31 = vcmp.eq.s32.totalorder %v25, 8
  %vm32 = vcmp.eq.s32.totalorder %v26, 8
  %vm33 = vmor %vm27, %vm30
  %vm34 = vmor %vm28, %vm31
  %vm35 = vmor %vm29, %vm32
  %vm36 = vcmp.eq.s32.totalorder %v24, 16
  %vm37 = vcmp.eq.s32.totalorder %v25, 16
  %vm38 = vcmp.eq.s32.totalorder %v26, 16
  %vm39 = vmor %vm33, %vm36
  %vm40 = vmor %vm34, %vm37
  %vm41 = vmor %vm35, %vm38
  %v42 = vsel %vm39, 0.0, 1.0
  %v43 = vsel %vm40, 0.0, 1.0
  %v44 = vsel %vm41, 0.0, 1.0
  %v45 = vrot.slane %v20, 7
  %v46 = vrot.slane %v21, 7
  %v47 = vrot.slane %v22, 7
  %vm48 = vcmp.lt.s32.totalorder %v24, 1
  %v49 = vsel %vm48, %v46, %v47
  %v50 = vsel %vm48, %v45, %v46
  %v51 = vsel %vm48, %v47, %v45
  %v52 = vsub.f32 %v20, %v51
  %v53 = vsub.f32 %v21, %v50
  %v54 = vsub.f32 %v22, %v49
  %v55 = vmul.f32 %v52, %v42
  %v56 = vmul.f32 %v53, %v43
  %v57 = vmul.f32 %v54, %v44
  %v58 = vrot.slane %v55, 7
  %v59 = vrot.slane %v56, 7
  %v60 = vsel %vm48, %v58, %v59
  %v61 = vsel %vm48, %v59, %v58
  %v62 = vsub.f32 %v55, %v61
  %v63 = vsub.f32 %v56, %v60
  %v64 = vmul.f32 %v62, %v42
  %v65 = vmul.f32 %v63, %v43
  %v66 = vmul.f32 %v20, %v20
  %v67 = vmul.f32 %v21, %v21
  %v68 = vadd.f32 %v66, %v67
  %v69 = vrsqrt.pop %v68
  %v70 = vmul.f32 %v68, %v69
  %vm71 = vcmp.eq.f32.partialorder %v68, inf
  %v72 = vsel %vm71, %v68, %v70
  %vm73 = vcmp.eq.f32.partialorder %v68, 0.0
  %v74 = vand.u32 %v68, 2147483648
  %v75 = vsel %vm73, %v74, %v72
  %76 = vst [vmem:[%s1 + $0x20] sm:$0xff] %v55
  %77 = vst [vmem:[%s1 + $0x28] sm:$0xff] %v56
  %78 = vst [vmem:[%s1 + $0x30] sm:$0xff] %v64
  %79 = vst [vmem:[%s1 + $0x38] sm:$0xff] %v65
  %80 = vst [vmem:[%s1 + $0x48] sm:$0xff] %v57
  %81 = vst [vmem:[%s1 + $0x50] sm:$0xff] %v75
  // Predicated region
  $region6: #{feature_augmenter.1} parent=0 // pred_check
    _
  $region7: #{feature_augmenter.1} parent=0 // pred_check_branch
    %83 = sbr.rel (0) target = $region9
  $region8: #{feature_augmenter.1} parent=0 // pred_region
    _
  $region9: #{feature_augmenter.1} parent=0 // pred_fallthru
    _
  // Predicated region
  $region10: #{feature_augmenter.1} parent=0 // pred_check
    _
  $region11: #{feature_augmenter.1} parent=0 // pred_check_branch
    %85 = sbr.rel (0) target = $region13
  $region12: #{feature_augmenter.1} parent=0 // pred_region
    _
  $region13: #{feature_augmenter.1} parent=0 // pred_fallthru
    _

</llo_original>
